<compile_context>
chip_gen: v7x
topology: tpu7x:2x2x1
jax: 0.10.0
libtpu: 0.0.40
codegen_flags: <defaults>
</compile_context>

<pallas_src>
import functools

import jax
import jax.numpy as jnp
from jax.experimental import pallas as pl
from jax.experimental.pallas import tpu as pltpu

LANES = 128
MAX_BLOCK_ROWS = 2048  # (2048, 128) f32 = 1 MiB per block; fits v5e/v6e/v7x VMEM easily


def _round_up(a, b):
    return ((a + b - 1) // b) * b


def _huber_reduce_kernel(x_ref, t_ref, o_ref, acc_ref, *,
                         delta, valid_rows, block_rows):
    j = pl.program_id(1)
    n_j = pl.num_programs(1)

    @pl.when(j == 0)
    def _():
        acc_ref[...] = jnp.zeros_like(acc_ref)

    err = x_ref[...].astype(jnp.float32) - t_ref[...].astype(jnp.float32)
    ae = jnp.abs(err)
    loss = jnp.where(ae < delta, 0.5 * err * err, delta * (ae - 0.5 * delta))

    # Mask rows beyond the real data: handles the ragged last block and the
    # duplicated (clamped) blocks of the padded per-core grid.  The <128-elem
    # zero pad inside the last valid row already contributes loss == 0.
    blk = pl.program_id(0) * n_j + j
    row0 = blk * block_rows
    rows = jax.lax.broadcasted_iota(jnp.int32, loss.shape, 0) + row0
    loss = jnp.where(rows < valid_rows, loss, 0.0)

    acc_ref[...] += loss  # vector accumulate; no per-step cross-lane reduce

    @pl.when(j == n_j - 1)
    def _():
        o_ref[0, 0] = jnp.sum(acc_ref[...])  # single horizontal reduce at the end


def _huber_elem_kernel(x_ref, t_ref, o_ref, *, delta):
    err = x_ref[...].astype(jnp.float32) - t_ref[...].astype(jnp.float32)
    ae = jnp.abs(err)
    loss = jnp.where(ae < delta, 0.5 * err * err, delta * (ae - 0.5 * delta))
    o_ref[...] = loss.astype(o_ref.dtype)


def _as_rows(x, t):
    n = x.size
    fx = x.reshape(-1)
    ft = t.reshape(-1)
    pad = (-n) % LANES
    if pad:
        # Rare ragged tail (<128 elems): zero-pad both so padded loss == 0.
        fx = jnp.pad(fx, (0, pad))
        ft = jnp.pad(ft, (0, pad))
    m = (n + pad) // LANES
    return fx.reshape(m, LANES), ft.reshape(m, LANES), n, m, pad


def huber_loss(x, t, delta=1.0, reduction="mean"):
    assert x.shape == t.shape
    x2, t2, n, m, pad = _as_rows(x, t)

    block_rows = min(MAX_BLOCK_ROWS, _round_up(m, 8))
    n_blocks = pl.cdiv(m, block_rows)

    if reduction in ("mean", "sum"):
        # Leading parallel axis of per-core partial sums (v7x megacore).
        n_partials = 2 if n_blocks >= 2 else 1
        steps = pl.cdiv(n_blocks, n_partials)

        def in_map(p, j):
            # clamp; over-count iterations are zeroed by the in-kernel row mask
            return (jnp.minimum(p * steps + j, n_blocks - 1), 0)

        kernel = functools.partial(_huber_reduce_kernel, delta=float(delta),
                                   valid_rows=m, block_rows=block_rows)
        partials = pl.pallas_call(
            kernel,
            out_shape=jax.ShapeDtypeStruct((n_partials, 1), jnp.float32),
            grid_spec=pltpu.PrefetchScalarGridSpec(
                num_scalar_prefetch=0,
                grid=(n_partials, steps),
                in_specs=[pl.BlockSpec((block_rows, LANES), in_map),
                          pl.BlockSpec((block_rows, LANES), in_map)],
                out_specs=pl.BlockSpec((1, 1), lambda p, j: (p, 0),
                                       memory_space=pltpu.SMEM),
                scratch_shapes=[pltpu.VMEM((block_rows, LANES), jnp.float32)],
            ),
            compiler_params=pltpu.CompilerParams(
                dimension_semantics=("parallel", "arbitrary")),
        )(x2, t2)
        total = jnp.sum(partials)
        if reduction == "mean":
            total = total / jnp.float32(n)
        return total

    # reduction == 'none': elementwise loss, same shape / dtype semantics as input
    out_dtype = jnp.result_type(x.dtype, t.dtype)
    kernel = functools.partial(_huber_elem_kernel, delta=float(delta))
    out = pl.pallas_call(
        kernel,
        out_shape=jax.ShapeDtypeStruct((m, LANES), out_dtype),
        grid_spec=pltpu.PrefetchScalarGridSpec(
            num_scalar_prefetch=0,
            grid=(n_blocks,),
            in_specs=[pl.BlockSpec((block_rows, LANES), lambda i: (i, 0)),
                      pl.BlockSpec((block_rows, LANES), lambda i: (i, 0))],
            out_specs=pl.BlockSpec((block_rows, LANES), lambda i: (i, 0)),
        ),
        compiler_params=pltpu.CompilerParams(
            dimension_semantics=("parallel",)),
    )(x2, t2)
    if pad:
        return out.reshape(-1)[:n].reshape(x.shape)
    return out.reshape(x.shape)


if __name__ == "__main__":
    key = jax.random.PRNGKey(0)
    k1, k2 = jax.random.split(key)
    # NCHW-like input pair (batch=2, channels=4, spatial=16x16)
    x = jax.random.normal(k1, (2, 4, 16, 16), dtype=jnp.float32) * 2.0
    t = jax.random.normal(k2, (2, 4, 16, 16), dtype=jnp.float32)

    delta = 1.0
    out_mean = jax.block_until_ready(huber_loss(x, t, delta=delta,
                                                reduction="mean"))
    out_sum = jax.block_until_ready(huber_loss(x, t, delta=delta,
                                               reduction="sum"))
    out_none = jax.block_until_ready(huber_loss(x, t, delta=delta,
                                                reduction="none"))

    # pure-JAX reference check
    err = x - t
    ae = jnp.abs(err)
    ref = jnp.where(ae < delta, 0.5 * err * err, delta * (ae - 0.5 * delta))
    assert jnp.allclose(out_mean, ref.mean(), rtol=1e-5, atol=1e-5)
    assert jnp.allclose(out_sum, ref.sum(), rtol=1e-5, atol=1e-4)
    assert jnp.allclose(out_none, ref, rtol=1e-5, atol=1e-6)

    print("KERNEL_OK")
</pallas_src>

<mosaic_0001>
module attributes {stable_mosaic.version = 11 : i64} {
  func.func @_huber_reduce_kernel(%arg0: i32, %arg1: i32, %arg2: memref<16x128xf32, #tpu.memory_space<vmem>>, %arg3: memref<16x128xf32, #tpu.memory_space<vmem>>, %arg4: memref<1x1xf32, #tpu.memory_space<smem>>, %arg5: memref<16x128xf32, #tpu.memory_space<vmem>>) attributes {dimension_semantics = [#tpu.dimension_semantics<parallel>, #tpu.dimension_semantics<arbitrary>], iteration_bounds = array<i64: 1, 1>, scalar_prefetch = 0 : i64, scratch_operands = 1 : i64, tpu.core_type = #tpu.core_type<tc>, window_params = [{transform_indices = @transform_0, window_bounds = array<i64: 16, 128>}, {transform_indices = @transform_1, window_bounds = array<i64: 16, 128>}, {transform_indices = @transform_2, window_bounds = array<i64: 1, 1>}]} {
    %c0_i32 = arith.constant 0 : i32
    %0 = arith.cmpi eq, %arg1, %c0_i32 : i32
    %1 = arith.extui %0 : i1 to i32
    %c0_i32_0 = arith.constant 0 : i32
    %2 = arith.cmpi ne, %1, %c0_i32_0 : i32
    scf.if %2 {
      %cst_15 = arith.constant 0.000000e+00 : f32
      %33 = vector.broadcast %cst_15 : f32 to vector<16x128xf32>
      %c0_16 = arith.constant 0 : index
      %c0_17 = arith.constant 0 : index
      %34 = vector.load %arg5[%c0_16, %c0_17] : memref<16x128xf32, #tpu.memory_space<vmem>>, vector<16x128xf32>
      tpu.vector_store %arg5[%c0_16, %c0_17], %33 {strides = array<i32>} : memref<16x128xf32, #tpu.memory_space<vmem>>, vector<16x128xf32>,
    } else {
    }
    %c0 = arith.constant 0 : index
    %c0_1 = arith.constant 0 : index
    %3 = vector.load %arg2[%c0, %c0_1] : memref<16x128xf32, #tpu.memory_space<vmem>>, vector<16x128xf32>
    %c0_2 = arith.constant 0 : index
    %c0_3 = arith.constant 0 : index
    %4 = vector.load %arg3[%c0_2, %c0_3] : memref<16x128xf32, #tpu.memory_space<vmem>>, vector<16x128xf32>
    %5 = arith.subf %3, %4 : vector<16x128xf32>
    %6 = math.absf %5 : vector<16x128xf32>
    %cst = arith.constant 1.000000e+00 : f32
    %7 = vector.broadcast %cst : f32 to vector<16x128xf32>
    %8 = arith.cmpf olt, %6, %7 : vector<16x128xf32>
    %cst_4 = arith.constant 5.000000e-01 : f32
    %9 = vector.broadcast %cst_4 : f32 to vector<16x128xf32>
    %10 = arith.mulf %9, %5 : vector<16x128xf32>
    %11 = arith.mulf %10, %5 : vector<16x128xf32>
    %cst_5 = arith.constant 5.000000e-01 : f32
    %12 = vector.broadcast %cst_5 : f32 to vector<16x128xf32>
    %13 = arith.subf %6, %12 : vector<16x128xf32>
    %cst_6 = arith.constant 1.000000e+00 : f32
    %14 = vector.broadcast %cst_6 : f32 to vector<16x128xf32>
    %15 = arith.mulf %14, %13 : vector<16x128xf32>
    %16 = arith.select %8, %11, %15 : vector<16x128xi1>, vector<16x128xf32>
    %c1_i32 = arith.constant 1 : i32
    %17 = arith.muli %arg0, %c1_i32 : i32
    %18 = arith.addi %17, %arg1 : i32
    %c16_i32 = arith.constant 16 : i32
    %19 = arith.muli %18, %c16_i32 : i32
    %20 = tpu.iota {dimensions = array<i32: 0>} : vector<16x128xi32>
    %21 = vector.broadcast %19 : i32 to vector<16x128xi32>
    %22 = arith.addi %20, %21 : vector<16x128xi32>
    %c16_i32_7 = arith.constant 16 : i32
    %23 = vector.broadcast %c16_i32_7 : i32 to vector<16x128xi32>
    %24 = arith.cmpi slt, %22, %23 : vector<16x128xi32>
    %cst_8 = arith.constant 0.000000e+00 : f32
    %25 = vector.broadcast %cst_8 : f32 to vector<16x128xf32>
    %26 = arith.select %24, %16, %25 : vector<16x128xi1>, vector<16x128xf32>
    %c0_9 = arith.constant 0 : index
    %c0_10 = arith.constant 0 : index
    %27 = vector.load %arg5[%c0_9, %c0_10] : memref<16x128xf32, #tpu.memory_space<vmem>>, vector<16x128xf32>
    %28 = arith.addf %27, %26 : vector<16x128xf32>
    %c0_11 = arith.constant 0 : index
    %c0_12 = arith.constant 0 : index
    %29 = vector.load %arg5[%c0_11, %c0_12] : memref<16x128xf32, #tpu.memory_space<vmem>>, vector<16x128xf32>
    tpu.vector_store %arg5[%c0_11, %c0_12], %28 {strides = array<i32>} : memref<16x128xf32, #tpu.memory_space<vmem>>, vector<16x128xf32>,
    %c0_i32_13 = arith.constant 0 : i32
    %30 = arith.cmpi eq, %arg1, %c0_i32_13 : i32
    %31 = arith.extui %30 : i1 to i32
    %c0_i32_14 = arith.constant 0 : i32
    %32 = arith.cmpi ne, %31, %c0_i32_14 : i32
    scf.if %32 {
      %c0_15 = arith.constant 0 : index
      %c0_16 = arith.constant 0 : index
      %33 = vector.load %arg5[%c0_15, %c0_16] : memref<16x128xf32, #tpu.memory_space<vmem>>, vector<16x128xf32>
      %34 = vector.shape_cast %33 : vector<16x128xf32> to vector<1x16x128xf32>
      %cst_17 = arith.constant dense<0.000000e+00> : vector<1xf32>
      %35 = vector.multi_reduction <add>, %34, %cst_17 [1, 2] : vector<1x16x128xf32> to vector<1xf32>
      %36 = vector.shape_cast %35 : vector<1xf32> to vector<1x1x1xf32>
      %37 = vector.extract %36[0, 0, 0] : f32 from vector<1x1x1xf32>
      %c0_18 = arith.constant 0 : index
      %c0_19 = arith.constant 0 : index
      %38 = memref.load %arg4[%c0_18, %c0_19] : memref<1x1xf32, #tpu.memory_space<smem>>
      memref.store %37, %arg4[%c0_18, %c0_19] : memref<1x1xf32, #tpu.memory_space<smem>>
    } else {
    }
    return
  }
  func.func @transform_0(%arg0: i32, %arg1: i32) -> (i32, i32) {
    %c1_i32 = arith.constant 1 : i32
    %0 = arith.muli %arg0, %c1_i32 : i32
    %1 = arith.addi %0, %arg1 : i32
    %c0_i32 = arith.constant 0 : i32
    %2 = arith.minsi %1, %c0_i32 : i32
    %c0_i32_0 = arith.constant 0 : i32
    %c0_i32_1 = arith.constant 0 : i32
    return %2, %c0_i32_0 : i32, i32
  }
  func.func @transform_1(%arg0: i32, %arg1: i32) -> (i32, i32) {
    %c1_i32 = arith.constant 1 : i32
    %0 = arith.muli %arg0, %c1_i32 : i32
    %1 = arith.addi %0, %arg1 : i32
    %c0_i32 = arith.constant 0 : i32
    %2 = arith.minsi %1, %c0_i32 : i32
    %c0_i32_0 = arith.constant 0 : i32
    %c0_i32_1 = arith.constant 0 : i32
    return %2, %c0_i32_0 : i32, i32
  }
  func.func @transform_2(%arg0: i32, %arg1: i32) -> (i32, i32) {
    %c0_i32 = arith.constant 0 : i32
    %c0_i32_0 = arith.constant 0 : i32
    return %arg0, %c0_i32 : i32, i32
  }
}

</mosaic_0001>

<llo_original>
// kernel: tpu_custom_call.1
$region0: #{tpu_custom_call.1}
  #allocation0 [shape = 'u32[]', space=smem, size = 0x4, offset = 0x4, fixed_abs, tag = 'smem constant byte address 0x4 - core index']
  #allocation1 [shape = 'u32[144,128]{1,0:T(1,128)}', space=vmem, size = 0x12000, scoped, tag = 'internal scratch']
  #allocation2 [shape = 'f32[16,128]{1,0:T(8,128)}', space=vmem, size = 0x2000, scoped, tag = 'scratch operand']
  %s0 = inlined_call_operand.hbm [shape: f32[16,128], index: 0, kind: input, shape index: {}]
  %s1 = inlined_call_operand.hbm [shape: f32[16,128], index: 1, kind: input, shape index: {}]
  %s2 = inlined_call_operand.hbm [shape: f32[1,1], index: 2, kind: output, shape index: {}]
  %s3 = sld [smem:[#allocation0]]
  $region34: #{tpu_custom_call.1} parent=0
    _
  %s5 = ssub.s32 1, %s3
  %s6 = scalar_select 0, %s5, %s3
  $region1: #{tpu_custom_call.1} parent=0
    #allocation3 [shape = 'u8[8192]{0}', space=vmem, size = 0x2000, scoped, tag = 'input window, operand 0, single buffered']
    #allocation4 [shape = 's32[1]{0}', space=sflag, size = 0x4, scoped, tag = 'scoped memory for tpu_custom_call.1']
    #allocation5 [shape = 's32[1]{0}', space=sflag, size = 0x4, scoped, tag = 'scoped memory for tpu_custom_call.1']
    #allocation6 [shape = 'u8[8192]{0}', space=vmem, size = 0x2000, scoped, tag = 'input window, operand 1, single buffered']
    #allocation7 [shape = 's32[1]{0}', space=sflag, size = 0x4, scoped, tag = 'scoped memory for tpu_custom_call.1']
    #allocation8 [shape = 'u8[512]{0}', space=smem, size = 0x200, scoped, tag = 'output window, operand 0, single buffered']
    %7 = vsyncpa [#allocation4], 0
    %8 = vsyncpa [#allocation7], 0
    %9 = vsyncpa [#allocation5], 0
    // Predicated region
    $region2: #{tpu_custom_call.1} parent=1 // pred_check
      _
    $region3: #{tpu_custom_call.1} parent=1 // pred_check_branch
      %11 = sbr.rel (0) target = $region5
    $region4: #{tpu_custom_call.1} parent=1 // pred_region
      %s12 = sadd.s32 0, 0
      %p13 = scmp.lt.s32.totalorder %s12, 0
      %s14 = scalar_select %p13, %s12, 0
      %s15 = smul.u32 2, %s14
      %s17 = ssub.s32 256, 256
      %18 = vsyncadd [#allocation4], %s17
      %s19 = smul.addr %s15, 128
      %s20 = scalar_lea.hbm %s0, %s19
      %s21 = sshll.u32 [#allocation3], 4
      %s22 = int_to_ptr.vmem [resolvable:$true] %s21
      %27 = dma.hbm_to_vmem [thread:$0]  %s20, 256, %s22, [#allocation4], 128, 128, 8
    $region5: #{tpu_custom_call.1} parent=1 // pred_fallthru
      _
    // Predicated region
    $region6: #{tpu_custom_call.1} parent=1 // pred_check
      _
    $region7: #{tpu_custom_call.1} parent=1 // pred_check_branch
      %29 = sbr.rel (0) target = $region9
    $region8: #{tpu_custom_call.1} parent=1 // pred_region
      %s30 = sadd.s32 0, 0
      %p31 = scmp.lt.s32.totalorder %s30, 0
      %s32 = scalar_select %p31, %s30, 0
      %s33 = smul.u32 2, %s32
      %s35 = ssub.s32 256, 256
      %36 = vsyncadd [#allocation7], %s35
      %s37 = smul.addr %s33, 128
      %s38 = scalar_lea.hbm %s1, %s37
      %s39 = sshll.u32 [#allocation6], 4
      %s40 = int_to_ptr.vmem [resolvable:$true] %s39
      %45 = dma.hbm_to_vmem [thread:$0]  %s38, 256, %s40, [#allocation7], 128, 128, 8
    $region9: #{tpu_custom_call.1} parent=1 // pred_fallthru
      _
    // Predicated region
    $region10: #{tpu_custom_call.1} parent=1 // pred_check
      _
    $region11: #{tpu_custom_call.1} parent=1 // pred_check_branch
      %47 = sbr.rel (0) target = $region13
    $region12: #{tpu_custom_call.1} parent=1 // pred_region
      %48 = dma.done [#allocation4], 256
    $region13: #{tpu_custom_call.1} parent=1 // pred_fallthru
      _
    // Predicated region
    $region14: #{tpu_custom_call.1} parent=1 // pred_check
      _
    $region15: #{tpu_custom_call.1} parent=1 // pred_check_branch
      %50 = sbr.rel (0) target = $region17
    $region16: #{tpu_custom_call.1} parent=1 // pred_region
      %51 = dma.done [#allocation7], 256
    $region17: #{tpu_custom_call.1} parent=1 // pred_fallthru
      _
    %s52 = sadd.s32 0, 0
    %p53 = scmp.lt.s32.totalorder %s52, 0
    %s54 = scalar_select %p53, %s52, 0
    %s55 = smul.u32 2, %s54
    %s56 = sadd.s32 0, 0
    %p57 = scmp.lt.s32.totalorder %s56, 0
    %s58 = scalar_select %p57, %s56, 0
    %s59 = smul.u32 2, %s58
    %p60 = scmp.eq.s32.totalorder 0, 0
    // Predicated region
    $region18: #{tpu_custom_call.1} parent=1 // pred_check
      %p61 = pneg %p60
    $region19: #{tpu_custom_call.1} parent=1 // pred_check_branch
      %63 = sbr.rel (%p61) target = $region21
    $region20: #{tpu_custom_call.1} parent=1 // pred_region
      %64 = vst [vmem:[#allocation2] sm:$0xff] 0.0
      %65 = vst [vmem:[#allocation2 + $0x8] sm:$0xff] 0.0
    $region21: #{tpu_custom_call.1} parent=1 // pred_fallthru
      _
    %v66 = vld [vmem:[#allocation3] sm:$0xff]
    %v67 = vld [vmem:[#allocation3 + $0x8] sm:$0xff]
    %v68 = vld [vmem:[#allocation6] sm:$0xff]
    %v69 = vld [vmem:[#allocation6 + $0x8] sm:$0xff]
    %v70 = vsub.f32 %v66, %v68
    %v71 = vsub.f32 %v67, %v69
    %v72 = vand.u32 2147483647, %v70
    %v73 = vand.u32 2147483647, %v71
    %vm74 = vcmp.lt.f32.partialorder %v72, 1.0
    %vm75 = vcmp.lt.f32.partialorder %v73, 1.0
    %v76 = vmul.f32 %v70, 0.5
    %v77 = vmul.f32 %v71, 0.5
    %v78 = vmul.f32 %v76, %v70
    %v79 = vmul.f32 %v77, %v71
    %v80 = vsub.f32 %v72, 0.5
    %v81 = vsub.f32 %v73, 0.5
    %v82 = vsel %vm74, %v78, %v80
    %v83 = vsel %vm75, %v79, %v81
    %s84 = sadd.s32 0, 0
    %s85 = smul.u32 %s84, 16
    %v86 = vlaneseq
    %v87 = vshrl.u32 %v86, 7
    %v88 = vadd.s32 %v87, 8
    %v89 = vstv %s85
    %v90 = vadd.s32 %v87, %v89
    %v91 = vadd.s32 %v88, %v89
    %vm92 = vcmp.lt.s32.totalorder %v90, 16
    %vm93 = vcmp.lt.s32.totalorder %v91, 16
    %v94 = vsel %vm92, %v82, 0.0
    %v95 = vsel %vm93, %v83, 0.0
    %v96 = vld [vmem:[#allocation2] sm:$0xff]
    %v97 = vld [vmem:[#allocation2 + $0x8] sm:$0xff]
    %v98 = vadd.f32 %v96, %v94
    %v99 = vadd.f32 %v97, %v95
    %100 = vst [vmem:[#allocation2] sm:$0xff] %v98
    %101 = vst [vmem:[#allocation2 + $0x8] sm:$0xff] %v99
    // Predicated region
    $region22: #{tpu_custom_call.1} parent=1 // pred_check
      %p102 = pneg %p60
    $region23: #{tpu_custom_call.1} parent=1 // pred_check_branch
      %104 = sbr.rel (%p102) target = $region25
    $region24: #{tpu_custom_call.1} parent=1 // pred_region
      %v105 = vld [vmem:[#allocation2] sm:$0xff]
      %v106 = vld [vmem:[#allocation2 + $0x8] sm:$0xff]
      %v107 = vadd.f32 %v105, %v106
      %108 = vadd.xlane.f32.xlu0 %v107
      %v109 = vpop.xlane.xlu0 %108
      %v110 = vrot.slane %v109, 4
      %v111 = vadd.f32 %v109, %v110
      %v112 = vrot.slane %v111, 2
      %v113 = vadd.f32 %v111, %v112
      %v114 = vrot.slane %v113, 1
      %v115 = vadd.f32 %v113, %v114
      %s116 = vtos %v115
      %s117 = scalar_lea.smem [#allocation8], 0
      %118 = sst [smem:[%s117]] %s116
    $region25: #{tpu_custom_call.1} parent=1 // pred_fallthru
      _
    // Predicated region
    $region26: #{tpu_custom_call.1} parent=1 // pred_check
      _
    $region27: #{tpu_custom_call.1} parent=1 // pred_check_branch
      %120 = sbr.rel (0) target = $region29
    $region28: #{tpu_custom_call.1} parent=1 // pred_region
      %s122 = ssub.s32 16, 16
      %123 = vsyncadd [#allocation5], %s122
      %126 = dma.smem_to_hbm [#allocation8], 16, %s2, [#allocation5]
    $region29: #{tpu_custom_call.1} parent=1 // pred_fallthru
      _
    // Predicated region
    $region30: #{tpu_custom_call.1} parent=1 // pred_check
      _
    $region31: #{tpu_custom_call.1} parent=1 // pred_check_branch
      %128 = sbr.rel (0) target = $region33
    $region32: #{tpu_custom_call.1} parent=1 // pred_region
      %129 = dma.done [#allocation5], 16
    $region33: #{tpu_custom_call.1} parent=1 // pred_fallthru
      _
    %130 = sfence
    %131 = vsyncpa [#allocation4], 1
    %132 = vsyncpa [#allocation7], 1
    %133 = vsyncpa [#allocation5], 1

</llo_original>
